<compile_context>
chip_gen: v5e
topology: v5e:2x2
jax: 0.10.0
libtpu: 0.0.40
codegen_flags: <defaults>
</compile_context>

<pallas_src>
import math
import numpy as np

import jax
import jax.numpy as jnp
from jax.experimental import pallas as pl
from jax.experimental.pallas import tpu as pltpu


S_DIM = 3        # s_dim (module default)
RF_NUM = 256     # rf_num / feature_dim (module default)
BATCH = 8

_LN_EPS = 1e-5        # Python float -> inlined literal inside the kernel
_MAX_BLOCK_B = 512    # batch tile size when amortizing over large batches


# ----------------------------------------------------------------------------- kernel

def _make_kernel(s_dim, rf_num):
    R = rf_num
    inv_R = 1.0 / R            # Python float literal
    g_row = s_dim + 1          # slab row of gamma; beta=+1, gamma*head=+2, beta*head=+3

    def kernel(s_ref, p_ref, o_ref):
        # p_ref layout (rows), lanes are [head1 | head2] each of width R:
        #   0 .. s_dim-1 : W_eff  (embed folded into fourier weights)
        #   s_dim        : b_eff  (embed folded into fourier bias)
        #   s_dim+1      : gamma
        #   s_dim+2      : beta
        #   s_dim+3      : gamma * head_weight
        #   s_dim+4      : beta  * head_weight
        #   (zero-padded to a multiple of 8 rows)
        p = p_ref[...]                                                  # (P, 2R)

        # s_ref is states augmented with a 1 at column s_dim and zeros after, so one aligned
        # MXU matmul yields z = states @ W_eff + b_eff (padded columns hit zero / affine rows
        # are multiplied by zero).
        z = jnp.dot(s_ref[...], p, preferred_element_type=jnp.float32)  # (Bb, 2R)

        gamma = p[g_row:g_row + 1, :]                                   # (1, 2R)
        beta = p[g_row + 1:g_row + 2, :]
        gh = p[g_row + 2:g_row + 3, :]                                  # gamma * head
        bh = p[g_row + 3:g_row + 4, :]                                  # beta  * head

        zz = z * z
        zgh = z * gh

        def one_head(lo, hi):
            zh = z[:, lo:hi]
            # Three independent lane reductions on z -> issue back-to-back on the XLU.
            s_z = jnp.sum(zh, axis=-1, keepdims=True)                   # (Bb, 1)
            s_zz = jnp.sum(zz[:, lo:hi], axis=-1, keepdims=True)        # (Bb, 1)
            s_zg = jnp.sum(zgh[:, lo:hi], axis=-1, keepdims=True)       # (Bb, 1)
            # Param-only reductions (off the critical path).
            s_gh = jnp.sum(gh[:, lo:hi], axis=-1, keepdims=True)        # (1, 1)
            s_bh = jnp.sum(bh[:, lo:hi], axis=-1, keepdims=True)        # (1, 1)

            mu = s_z * inv_R
            var = s_zz * inv_R - mu * mu
            rstd = jax.lax.rsqrt(var + _LN_EPS)

            x = (zh - mu) * (rstd * gamma[:, lo:hi]) + beta[:, lo:hi]
            # q = sum(x * head) refolded so it only needs the scalars above.
            q = rstd * (s_zg - mu * s_gh) + s_bh
            return x, q

        x1, q1 = one_head(0, R)
        x2, q2 = one_head(R, 2 * R)

        # Fused, lane-dense output: [x1 | x2 | q-block], q1 in lane 0 / q2 in lane 1 of the
        # trailing 128-lane block.  One full (Bb, 2R+128) store -> single writeback DMA.
        lane = jax.lax.broadcasted_iota(jnp.int32, (z.shape[0], 128), 1)
        qblk = jnp.where(lane == 0, q1, jnp.where(lane == 1, q2, 0.0))
        o_ref[...] = jnp.concatenate([x1, x2, qblk], axis=-1)

    return kernel


# ----------------------------------------------------------------------------- params

def make_rfv_critic_params(key, s_dim=S_DIM, rf_num=RF_NUM, sigma=0.0):
    """Raw parameters mirroring RFVCritic.__init__ (weights stored transposed as [in, out])."""
    k1, k2, k3, k4, k5, k6 = jax.random.split(key, 6)

    # embed: identity weight, zero bias (embedding_dim == -1 branch)
    embed_w = jnp.eye(s_dim, dtype=jnp.float32)
    embed_b = jnp.zeros((1, s_dim), dtype=jnp.float32)

    std = (1.0 / sigma) if sigma > 0 else 1.0
    f1_w = std * jax.random.normal(k1, (s_dim, rf_num), dtype=jnp.float32)
    f1_b = jax.random.uniform(k2, (1, rf_num), dtype=jnp.float32,
                              minval=0.0, maxval=2.0 * math.pi)
    f2_w = std * jax.random.normal(k3, (s_dim, rf_num), dtype=jnp.float32)
    f2_b = jax.random.uniform(k4, (1, rf_num), dtype=jnp.float32,
                              minval=0.0, maxval=2.0 * math.pi)

    # LayerNorm: elementwise affine, gamma=1, beta=0 (beta frozen)
    n1_w = jnp.ones((1, rf_num), dtype=jnp.float32)
    n1_b = jnp.zeros((1, rf_num), dtype=jnp.float32)
    n2_w = jnp.ones((1, rf_num), dtype=jnp.float32)
    n2_b = jnp.zeros((1, rf_num), dtype=jnp.float32)

    # output heads: nn.Linear default uniform weight init, bias zeroed/frozen
    bound = 1.0 / math.sqrt(rf_num)
    o1_w = jax.random.uniform(k5, (1, rf_num), dtype=jnp.float32, minval=-bound, maxval=bound)
    o2_w = jax.random.uniform(k6, (1, rf_num), dtype=jnp.float32, minval=-bound, maxval=bound)

    return (embed_w, embed_b, f1_w, f1_b, f2_w, f2_b,
            n1_w, n1_b, n2_w, n2_b, o1_w, o2_w)


def pack_rfv_params(params):
    """Fold the (linear) embed into the fourier layers and pack everything into one VMEM slab."""
    (ew, eb, f1w, f1b, f2w, f2b, n1w, n1b, n2w, n2b, o1w, o2w) = params

    # Exact algebraic folding: (s @ ew + eb) @ fw + fb == s @ (ew @ fw) + (eb @ fw + fb)
    fw = jnp.concatenate([ew @ f1w, ew @ f2w], axis=1)               # (s_dim, 2R)
    fb = jnp.concatenate([eb @ f1w + f1b, eb @ f2w + f2b], axis=1)   # (1, 2R)
    gamma = jnp.concatenate([n1w, n2w], axis=1)
    beta = jnp.concatenate([n1b, n2b], axis=1)
    gh = jnp.concatenate([n1w * o1w, n2w * o2w], axis=1)             # gamma * head
    bh = jnp.concatenate([n1b * o1w, n2b * o2w], axis=1)             # beta  * head

    slab = jnp.concatenate([fw, fb, gamma, beta, gh, bh], axis=0)    # (s_dim + 5, 2R)
    pad = (-slab.shape[0]) % 8
    if pad:
        slab = jnp.concatenate(
            [slab, jnp.zeros((pad, slab.shape[1]), jnp.float32)], axis=0)
    return slab


# ----------------------------------------------------------------------------- forward

@jax.jit
def rfv_critic_forward(states, packed_params):
    """Pallas-backed forward.

    states: [B, s_dim] f32; packed_params: (P, 2R) slab from pack_rfv_params.
    Returns the fused output slab [B, 2R + 128]:
      lanes [0,R) = x1, [R,2R) = x2, lane 2R = q1, lane 2R+1 = q2.
    """
    batch, s_dim = states.shape
    n_rows, two_r = packed_params.shape
    rf_num = two_r // 2

    # Homogeneous augmentation: [states | 1 | 0 ...] of width == slab rows, so the in-kernel
    # matmul is fully aligned and folds the fourier bias for free.
    s_aug = jnp.concatenate(
        [states.astype(jnp.float32),
         jnp.ones((batch, 1), jnp.float32),
         jnp.zeros((batch, n_rows - s_dim - 1), jnp.float32)], axis=1)   # (B, n_rows)

    # Batch tiling: single tile for small calls; pipelined "parallel" tiles for big batches.
    block_b = batch if batch <= _MAX_BLOCK_B else _MAX_BLOCK_B
    n_blk = pl.cdiv(batch, block_b)
    padded = n_blk * block_b
    if padded != batch:
        s_aug = jnp.concatenate(
            [s_aug, jnp.zeros((padded - batch, n_rows), jnp.float32)], axis=0)

    out = pl.pallas_call(
        _make_kernel(s_dim, rf_num),
        grid=(n_blk,),
        in_specs=[pl.BlockSpec((block_b, n_rows), lambda i: (i, 0)),
                  pl.BlockSpec((n_rows, two_r), lambda i: (0, 0))],   # params stay resident
        out_specs=pl.BlockSpec((block_b, two_r + 128), lambda i: (i, 0)),
        out_shape=jax.ShapeDtypeStruct((padded, two_r + 128), jnp.float32),
        compiler_params=pltpu.CompilerParams(dimension_semantics=("parallel",)),
    )(s_aug, packed_params)

    return out[:batch] if padded != batch else out


def rfv_critic_apply(states, packed_params):
    """Module-compatible API: returns (x1, x2, q1, q2)."""
    out = rfv_critic_forward(states, packed_params)
    rf_num = packed_params.shape[1] // 2
    return (out[:, :rf_num], out[:, rf_num:2 * rf_num],
            out[:, 2 * rf_num:2 * rf_num + 1], out[:, 2 * rf_num + 1:2 * rf_num + 2])


# ----------------------------------------------------------------------------- reference

def _reference_forward(states, params):
    (ew, eb, f1w, f1b, f2w, f2b, n1w, n1b, n2w, n2b, o1w, o2w) = params
    eps = 1e-5
    x = states @ ew + eb
    z1 = x @ f1w + f1b
    z2 = x @ f2w + f2b

    def ln(z, g, b):
        mu = jnp.mean(z, axis=-1, keepdims=True)
        var = jnp.mean((z - mu) ** 2, axis=-1, keepdims=True)
        return (z - mu) / jnp.sqrt(var + eps) * g + b

    x1 = ln(z1, n1w, n1b)
    x2 = ln(z2, n2w, n2b)
    q1 = jnp.sum(x1 * o1w, axis=-1, keepdims=True)
    q2 = jnp.sum(x2 * o2w, axis=-1, keepdims=True)
    return x1, x2, q1, q2


if __name__ == "__main__":
    key = jax.random.PRNGKey(0)
    k_params, k_states = jax.random.split(key)

    params = make_rfv_critic_params(k_params, s_dim=S_DIM, rf_num=RF_NUM, sigma=0.0)
    packed = pack_rfv_params(params)                 # done once, outside the forward path
    states = jax.random.normal(k_states, (BATCH, S_DIM), dtype=jnp.float32)

    x1, x2, q1, q2 = jax.block_until_ready(rfv_critic_apply(states, packed))

    # sanity check against plain-JAX reference of the original (unfolded) module
    rx1, rx2, rq1, rq2 = _reference_forward(states, params)
    np.testing.assert_allclose(np.asarray(x1), np.asarray(rx1), rtol=1e-4, atol=1e-4)
    np.testing.assert_allclose(np.asarray(x2), np.asarray(rx2), rtol=1e-4, atol=1e-4)
    np.testing.assert_allclose(np.asarray(q1), np.asarray(rq1), rtol=1e-4, atol=1e-4)
    np.testing.assert_allclose(np.asarray(q2), np.asarray(rq2), rtol=1e-4, atol=1e-4)

    assert x1.shape == (BATCH, RF_NUM) and x2.shape == (BATCH, RF_NUM)
    assert q1.shape == (BATCH, 1) and q2.shape == (BATCH, 1)

    print("KERNEL_OK")
</pallas_src>

<mosaic_0001>
module attributes {stable_mosaic.version = 11 : i64} {
  func.func @kernel(%arg0: i32, %arg1: memref<8x8xf32, #tpu.memory_space<vmem>>, %arg2: memref<8x512xf32, #tpu.memory_space<vmem>>, %arg3: memref<8x640xf32, #tpu.memory_space<vmem>>) attributes {dimension_semantics = [#tpu.dimension_semantics<parallel>], iteration_bounds = array<i64: 1>, scalar_prefetch = 0 : i64, scratch_operands = 0 : i64, tpu.core_type = #tpu.core_type<tc>, window_params = [{transform_indices = @transform_0, window_bounds = array<i64: 8, 8>}, {pipeline_mode = #tpu.pipeline_mode<synchronous>, transform_indices = @transform_1, window_bounds = array<i64: 8, 512>}, {transform_indices = @transform_2, window_bounds = array<i64: 8, 640>}]} {
    %c0 = arith.constant 0 : index
    %c0_0 = arith.constant 0 : index
    %0 = vector.load %arg2[%c0, %c0_0] : memref<8x512xf32, #tpu.memory_space<vmem>>, vector<8x512xf32>
    %c0_1 = arith.constant 0 : index
    %c0_2 = arith.constant 0 : index
    %1 = vector.load %arg1[%c0_1, %c0_2] : memref<8x8xf32, #tpu.memory_space<vmem>>, vector<8x8xf32>
    %cst = arith.constant dense<0.000000e+00> : vector<8x512xf32>
    %2 = tpu.matmul %1, %0, %cst {dimension_numbers = #tpu.dot_dimension_numbers<[1], [0], [0], [1], [0, 0, 1, 1], [], []>} : vector<8x8xf32>, vector<8x512xf32>, vector<8x512xf32> -> vector<8x512xf32>
    %3 = vector.extract_strided_slice %0 {offsets = [4, 0], sizes = [1, 512], strides = [1, 1]} : vector<8x512xf32> to vector<1x512xf32>
    %4 = vector.extract_strided_slice %0 {offsets = [5, 0], sizes = [1, 512], strides = [1, 1]} : vector<8x512xf32> to vector<1x512xf32>
    %5 = vector.extract_strided_slice %0 {offsets = [6, 0], sizes = [1, 512], strides = [1, 1]} : vector<8x512xf32> to vector<1x512xf32>
    %6 = vector.extract_strided_slice %0 {offsets = [7, 0], sizes = [1, 512], strides = [1, 1]} : vector<8x512xf32> to vector<1x512xf32>
    %7 = arith.mulf %2, %2 : vector<8x512xf32>
    %8 = vector.broadcast %5 : vector<1x512xf32> to vector<8x512xf32>
    %9 = arith.mulf %2, %8 : vector<8x512xf32>
    %10 = vector.extract_strided_slice %2 {offsets = [0, 0], sizes = [8, 256], strides = [1, 1]} : vector<8x512xf32> to vector<8x256xf32>
    %cst_3 = arith.constant dense<0.000000e+00> : vector<8xf32>
    %11 = vector.multi_reduction <add>, %10, %cst_3 [1] : vector<8x256xf32> to vector<8xf32>
    %12 = vector.shape_cast %11 : vector<8xf32> to vector<8x1xf32>
    %13 = vector.extract_strided_slice %7 {offsets = [0, 0], sizes = [8, 256], strides = [1, 1]} : vector<8x512xf32> to vector<8x256xf32>
    %cst_4 = arith.constant dense<0.000000e+00> : vector<8xf32>
    %14 = vector.multi_reduction <add>, %13, %cst_4 [1] : vector<8x256xf32> to vector<8xf32>
    %15 = vector.shape_cast %14 : vector<8xf32> to vector<8x1xf32>
    %16 = vector.extract_strided_slice %9 {offsets = [0, 0], sizes = [8, 256], strides = [1, 1]} : vector<8x512xf32> to vector<8x256xf32>
    %cst_5 = arith.constant dense<0.000000e+00> : vector<8xf32>
    %17 = vector.multi_reduction <add>, %16, %cst_5 [1] : vector<8x256xf32> to vector<8xf32>
    %18 = vector.shape_cast %17 : vector<8xf32> to vector<8x1xf32>
    %19 = vector.extract_strided_slice %5 {offsets = [0, 0], sizes = [1, 256], strides = [1, 1]} : vector<1x512xf32> to vector<1x256xf32>
    %cst_6 = arith.constant dense<0.000000e+00> : vector<1xf32>
    %20 = vector.multi_reduction <add>, %19, %cst_6 [1] : vector<1x256xf32> to vector<1xf32>
    %21 = vector.shape_cast %20 : vector<1xf32> to vector<1x1xf32>
    %22 = vector.extract_strided_slice %6 {offsets = [0, 0], sizes = [1, 256], strides = [1, 1]} : vector<1x512xf32> to vector<1x256xf32>
    %cst_7 = arith.constant dense<0.000000e+00> : vector<1xf32>
    %23 = vector.multi_reduction <add>, %22, %cst_7 [1] : vector<1x256xf32> to vector<1xf32>
    %24 = vector.shape_cast %23 : vector<1xf32> to vector<1x1xf32>
    %cst_8 = arith.constant 3.906250e-03 : f32
    %25 = vector.broadcast %cst_8 : f32 to vector<8x1xf32>
    %26 = arith.mulf %12, %25 : vector<8x1xf32>
    %cst_9 = arith.constant 3.906250e-03 : f32
    %27 = vector.broadcast %cst_9 : f32 to vector<8x1xf32>
    %28 = arith.mulf %15, %27 : vector<8x1xf32>
    %29 = arith.mulf %26, %26 : vector<8x1xf32>
    %30 = arith.subf %28, %29 : vector<8x1xf32>
    %cst_10 = arith.constant 9.99999974E-6 : f32
    %31 = vector.broadcast %cst_10 : f32 to vector<8x1xf32>
    %32 = arith.addf %30, %31 : vector<8x1xf32>
    %33 = math.rsqrt %32 : vector<8x1xf32>
    %34 = vector.broadcast %26 : vector<8x1xf32> to vector<8x256xf32>
    %35 = arith.subf %10, %34 : vector<8x256xf32>
    %36 = vector.extract_strided_slice %3 {offsets = [0, 0], sizes = [1, 256], strides = [1, 1]} : vector<1x512xf32> to vector<1x256xf32>
    %37 = vector.broadcast %33 : vector<8x1xf32> to vector<8x256xf32>
    %38 = vector.broadcast %36 : vector<1x256xf32> to vector<8x256xf32>
    %39 = arith.mulf %37, %38 : vector<8x256xf32>
    %40 = arith.mulf %35, %39 : vector<8x256xf32>
    %41 = vector.extract_strided_slice %4 {offsets = [0, 0], sizes = [1, 256], strides = [1, 1]} : vector<1x512xf32> to vector<1x256xf32>
    %42 = vector.broadcast %41 : vector<1x256xf32> to vector<8x256xf32>
    %43 = arith.addf %40, %42 : vector<8x256xf32>
    %44 = vector.broadcast %21 : vector<1x1xf32> to vector<8x1xf32>
    %45 = arith.mulf %26, %44 : vector<8x1xf32>
    %46 = arith.subf %18, %45 : vector<8x1xf32>
    %47 = arith.mulf %33, %46 : vector<8x1xf32>
    %48 = vector.broadcast %24 : vector<1x1xf32> to vector<8x1xf32>
    %49 = arith.addf %47, %48 : vector<8x1xf32>
    %50 = vector.extract_strided_slice %2 {offsets = [0, 256], sizes = [8, 256], strides = [1, 1]} : vector<8x512xf32> to vector<8x256xf32>
    %cst_11 = arith.constant dense<0.000000e+00> : vector<8xf32>
    %51 = vector.multi_reduction <add>, %50, %cst_11 [1] : vector<8x256xf32> to vector<8xf32>
    %52 = vector.shape_cast %51 : vector<8xf32> to vector<8x1xf32>
    %53 = vector.extract_strided_slice %7 {offsets = [0, 256], sizes = [8, 256], strides = [1, 1]} : vector<8x512xf32> to vector<8x256xf32>
    %cst_12 = arith.constant dense<0.000000e+00> : vector<8xf32>
    %54 = vector.multi_reduction <add>, %53, %cst_12 [1] : vector<8x256xf32> to vector<8xf32>
    %55 = vector.shape_cast %54 : vector<8xf32> to vector<8x1xf32>
    %56 = vector.extract_strided_slice %9 {offsets = [0, 256], sizes = [8, 256], strides = [1, 1]} : vector<8x512xf32> to vector<8x256xf32>
    %cst_13 = arith.constant dense<0.000000e+00> : vector<8xf32>
    %57 = vector.multi_reduction <add>, %56, %cst_13 [1] : vector<8x256xf32> to vector<8xf32>
    %58 = vector.shape_cast %57 : vector<8xf32> to vector<8x1xf32>
    %59 = vector.extract_strided_slice %5 {offsets = [0, 256], sizes = [1, 256], strides = [1, 1]} : vector<1x512xf32> to vector<1x256xf32>
    %cst_14 = arith.constant dense<0.000000e+00> : vector<1xf32>
    %60 = vector.multi_reduction <add>, %59, %cst_14 [1] : vector<1x256xf32> to vector<1xf32>
    %61 = vector.shape_cast %60 : vector<1xf32> to vector<1x1xf32>
    %62 = vector.extract_strided_slice %6 {offsets = [0, 256], sizes = [1, 256], strides = [1, 1]} : vector<1x512xf32> to vector<1x256xf32>
    %cst_15 = arith.constant dense<0.000000e+00> : vector<1xf32>
    %63 = vector.multi_reduction <add>, %62, %cst_15 [1] : vector<1x256xf32> to vector<1xf32>
    %64 = vector.shape_cast %63 : vector<1xf32> to vector<1x1xf32>
    %cst_16 = arith.constant 3.906250e-03 : f32
    %65 = vector.broadcast %cst_16 : f32 to vector<8x1xf32>
    %66 = arith.mulf %52, %65 : vector<8x1xf32>
    %cst_17 = arith.constant 3.906250e-03 : f32
    %67 = vector.broadcast %cst_17 : f32 to vector<8x1xf32>
    %68 = arith.mulf %55, %67 : vector<8x1xf32>
    %69 = arith.mulf %66, %66 : vector<8x1xf32>
    %70 = arith.subf %68, %69 : vector<8x1xf32>
    %cst_18 = arith.constant 9.99999974E-6 : f32
    %71 = vector.broadcast %cst_18 : f32 to vector<8x1xf32>
    %72 = arith.addf %70, %71 : vector<8x1xf32>
    %73 = math.rsqrt %72 : vector<8x1xf32>
    %74 = vector.broadcast %66 : vector<8x1xf32> to vector<8x256xf32>
    %75 = arith.subf %50, %74 : vector<8x256xf32>
    %76 = vector.extract_strided_slice %3 {offsets = [0, 256], sizes = [1, 256], strides = [1, 1]} : vector<1x512xf32> to vector<1x256xf32>
    %77 = vector.broadcast %73 : vector<8x1xf32> to vector<8x256xf32>
    %78 = vector.broadcast %76 : vector<1x256xf32> to vector<8x256xf32>
    %79 = arith.mulf %77, %78 : vector<8x256xf32>
    %80 = arith.mulf %75, %79 : vector<8x256xf32>
    %81 = vector.extract_strided_slice %4 {offsets = [0, 256], sizes = [1, 256], strides = [1, 1]} : vector<1x512xf32> to vector<1x256xf32>
    %82 = vector.broadcast %81 : vector<1x256xf32> to vector<8x256xf32>
    %83 = arith.addf %80, %82 : vector<8x256xf32>
    %84 = vector.broadcast %61 : vector<1x1xf32> to vector<8x1xf32>
    %85 = arith.mulf %66, %84 : vector<8x1xf32>
    %86 = arith.subf %58, %85 : vector<8x1xf32>
    %87 = arith.mulf %73, %86 : vector<8x1xf32>
    %88 = vector.broadcast %64 : vector<1x1xf32> to vector<8x1xf32>
    %89 = arith.addf %87, %88 : vector<8x1xf32>
    %90 = tpu.iota {dimensions = array<i32: 1>} : vector<8x128xi32>
    %c0_i32 = arith.constant 0 : i32
    %91 = vector.broadcast %c0_i32 : i32 to vector<8x128xi32>
    %92 = arith.cmpi eq, %90, %91 : vector<8x128xi32>
    %c1_i32 = arith.constant 1 : i32
    %93 = vector.broadcast %c1_i32 : i32 to vector<8x128xi32>
    %94 = arith.cmpi eq, %90, %93 : vector<8x128xi32>
    %cst_19 = arith.constant 0.000000e+00 : f32
    %95 = vector.shape_cast %89 : vector<8x1xf32> to vector<8x1xf32>
    %96 = vector.broadcast %95 : vector<8x1xf32> to vector<8x128xf32>
    %97 = vector.broadcast %cst_19 : f32 to vector<8x128xf32>
    %98 = arith.select %94, %96, %97 : vector<8x128xi1>, vector<8x128xf32>
    %99 = vector.shape_cast %49 : vector<8x1xf32> to vector<8x1xf32>
    %100 = vector.broadcast %99 : vector<8x1xf32> to vector<8x128xf32>
    %101 = arith.select %92, %100, %98 : vector<8x128xi1>, vector<8x128xf32>
    %102 = tpu.concatenate %43, %83, %101 in 1 : vector<8x256xf32>, vector<8x256xf32>, vector<8x128xf32> -> vector<8x640xf32>
    %c0_20 = arith.constant 0 : index
    %c0_21 = arith.constant 0 : index
    %103 = vector.load %arg3[%c0_20, %c0_21] : memref<8x640xf32, #tpu.memory_space<vmem>>, vector<8x640xf32>
    tpu.vector_store %arg3[%c0_20, %c0_21], %102 {strides = array<i32>} : memref<8x640xf32, #tpu.memory_space<vmem>>, vector<8x640xf32>,
    return
  }
  func.func @transform_0(%arg0: i32) -> (i32, i32) {
    %c0_i32 = arith.constant 0 : i32
    %c0_i32_0 = arith.constant 0 : i32
    return %arg0, %c0_i32 : i32, i32
  }
  func.func @transform_1(%arg0: i32) -> (i32, i32) {
    %c0_i32 = arith.constant 0 : i32
    %c0_i32_0 = arith.constant 0 : i32
    %c0_i32_1 = arith.constant 0 : i32
    return %c0_i32, %c0_i32_0 : i32, i32
  }
  func.func @transform_2(%arg0: i32) -> (i32, i32) {
    %c0_i32 = arith.constant 0 : i32
    %c0_i32_0 = arith.constant 0 : i32
    return %arg0, %c0_i32 : i32, i32
  }
}

</mosaic_0001>

<llo_original>
// kernel: rfv_critic_forward.1
$region0: #{rfv_critic_forward.1}
  #allocation0 [shape = 'u32[]', space=smem, size = 0x4, offset = 0x4, fixed_abs, tag = 'smem constant byte address 0x4 - core index']
  #allocation1 [shape = 'u32[72,128]{1,0:T(1,128)}', space=vmem, size = 0x9000, scoped, tag = 'internal scratch']
  %s0 = inlined_call_operand.vmem [shape: f32[8,8], index: 0, kind: input, shape index: {}]
  %s1 = inlined_call_operand.vmem [shape: f32[8,512], index: 1, kind: input, shape index: {}]
  %s2 = inlined_call_operand.hbm [shape: f32[8,640], index: 2, kind: output, shape index: {}]
  %s3 = sld [smem:[#allocation0]]
  $region18: #{rfv_critic_forward.1} parent=0
    _
  %s5 = ssub.s32 1, %s3
  %s6 = scalar_select 0, %s5, %s3
  $region1: #{rfv_critic_forward.1} parent=0
    #allocation2 [shape = 'u8[20480]{0}', space=vmem, size = 0x5000, scoped, tag = 'output window, operand 0, single buffered']
    #allocation3 [shape = 's32[1]{0}', space=sflag, size = 0x4, scoped, tag = 'scoped memory for rfv_critic_forward.1']
    %7 = vsyncpa [#allocation3], 0
    // Predicated region
    $region2: #{rfv_critic_forward.1} parent=1 // pred_check
      _
    $region3: #{rfv_critic_forward.1} parent=1 // pred_check_branch
      %9 = sbr.rel (0) target = $region5
    $region4: #{rfv_critic_forward.1} parent=1 // pred_region
      _
    $region5: #{rfv_critic_forward.1} parent=1 // pred_fallthru
      _
    // Predicated region
    $region6: #{rfv_critic_forward.1} parent=1 // pred_check
      _
    $region7: #{rfv_critic_forward.1} parent=1 // pred_check_branch
      %11 = sbr.rel (0) target = $region9
    $region8: #{rfv_critic_forward.1} parent=1 // pred_region
      _
    $region9: #{rfv_critic_forward.1} parent=1 // pred_fallthru
      _
    %v12 = vld [vmem:[%s1] sm:$0xff]
    %v13 = vld [vmem:[%s1 + $0x8] sm:$0xff]
    %v14 = vld [vmem:[%s1 + $0x10] sm:$0xff]
    %v15 = vld [vmem:[%s1 + $0x18] sm:$0xff]
    %v16 = vld [vmem:[%s0] sm:$0xff]
    %vm17 = vcmask 64512
    %v19 = vsel %vm17, %v16, 0
    %21 = vmatpush.msra.mxu0 0.0
    %22 = vmatpush.msra.mxu0 0.0
    %23 = vmatpush.msra.mxu0 0.0
    %24 = vmatpush.msra.mxu0 0.0
    %25 = vmatpush.msra.mxu0 0.0
    %26 = vmatpush.msra.mxu0 0.0
    %27 = vmatpush.msra.mxu0 0.0
    %28 = vmatpush.msra.mxu0 0.0
    %29 = vmatpush.msra.mxu0 0.0
    %30 = vmatpush.msra.mxu0 0.0
    %31 = vmatpush.msra.mxu0 0.0
    %32 = vmatpush.msra.mxu0 0.0
    %33 = vmatpush.msra.mxu0 0.0
    %34 = vmatpush.msra.mxu0 0.0
    %35 = vmatpush.msra.mxu0 0.0
    %36 = vmatpush.msra.mxu0 %v12
    %37 = vmatmul.f32.gmra.mxu0 %v19
    %v38 = vpop.f32.mrf.mxu0
    %v39 = vadd.f32 0.0, %v38
    %40 = vdwg.mxu0
    %41 = vmatpush.msra.mxu0 0.0
    %42 = vmatpush.msra.mxu0 0.0
    %43 = vmatpush.msra.mxu0 0.0
    %44 = vmatpush.msra.mxu0 0.0
    %45 = vmatpush.msra.mxu0 0.0
    %46 = vmatpush.msra.mxu0 0.0
    %47 = vmatpush.msra.mxu0 0.0
    %48 = vmatpush.msra.mxu0 0.0
    %49 = vmatpush.msra.mxu0 0.0
    %50 = vmatpush.msra.mxu0 0.0
    %51 = vmatpush.msra.mxu0 0.0
    %52 = vmatpush.msra.mxu0 0.0
    %53 = vmatpush.msra.mxu0 0.0
    %54 = vmatpush.msra.mxu0 0.0
    %55 = vmatpush.msra.mxu0 0.0
    %56 = vmatpush.msra.mxu0 %v13
    %57 = vmatmul.f32.gmra.mxu0 %v19
    %v58 = vpop.f32.mrf.mxu0
    %v59 = vadd.f32 0.0, %v58
    %60 = vdwg.mxu0
    %61 = vmatpush.msra.mxu0 0.0
    %62 = vmatpush.msra.mxu0 0.0
    %63 = vmatpush.msra.mxu0 0.0
    %64 = vmatpush.msra.mxu0 0.0
    %65 = vmatpush.msra.mxu0 0.0
    %66 = vmatpush.msra.mxu0 0.0
    %67 = vmatpush.msra.mxu0 0.0
    %68 = vmatpush.msra.mxu0 0.0
    %69 = vmatpush.msra.mxu0 0.0
    %70 = vmatpush.msra.mxu0 0.0
    %71 = vmatpush.msra.mxu0 0.0
    %72 = vmatpush.msra.mxu0 0.0
    %73 = vmatpush.msra.mxu0 0.0
    %74 = vmatpush.msra.mxu0 0.0
    %75 = vmatpush.msra.mxu0 0.0
    %76 = vmatpush.msra.mxu0 %v14
    %77 = vmatmul.f32.gmra.mxu0 %v19
    %v78 = vpop.f32.mrf.mxu0
    %v79 = vadd.f32 0.0, %v78
    %80 = vdwg.mxu0
    %81 = vmatpush.msra.mxu0 0.0
    %82 = vmatpush.msra.mxu0 0.0
    %83 = vmatpush.msra.mxu0 0.0
    %84 = vmatpush.msra.mxu0 0.0
    %85 = vmatpush.msra.mxu0 0.0
    %86 = vmatpush.msra.mxu0 0.0
    %87 = vmatpush.msra.mxu0 0.0
    %88 = vmatpush.msra.mxu0 0.0
    %89 = vmatpush.msra.mxu0 0.0
    %90 = vmatpush.msra.mxu0 0.0
    %91 = vmatpush.msra.mxu0 0.0
    %92 = vmatpush.msra.mxu0 0.0
    %93 = vmatpush.msra.mxu0 0.0
    %94 = vmatpush.msra.mxu0 0.0
    %95 = vmatpush.msra.mxu0 0.0
    %96 = vmatpush.msra.mxu0 %v15
    %97 = vmatmul.f32.gmra.mxu0 %v19
    %v98 = vpop.f32.mrf.mxu0
    %v99 = vadd.f32 0.0, %v98
    %100 = vdwg.mxu0
    %v101 = vmul.f32 %v39, %v39
    %v102 = vmul.f32 %v59, %v59
    %v103 = vmul.f32 %v79, %v79
    %v104 = vmul.f32 %v99, %v99
    %v105 = vperm.slane %v12, 6
    %v106 = vperm.slane %v13, 6
    %v107 = vperm.slane %v14, 6
    %v108 = vperm.slane %v15, 6
    %v109 = vmul.f32 %v39, %v105
    %v110 = vmul.f32 %v59, %v106
    %v111 = vmul.f32 %v79, %v107
    %v112 = vmul.f32 %v99, %v108
    %v113 = vadd.f32 %v39, %v59
    %114 = vadd.xlane.f32.xlu0 %v113
    %v115 = vpop.xlane.xlu0 %114
    %v116 = vadd.f32 %v101, %v102
    %117 = vadd.xlane.f32.xlu0 %v116
    %v118 = vpop.xlane.xlu0 %117
    %v119 = vadd.f32 %v109, %v110
    %120 = vadd.xlane.f32.xlu0 %v119
    %v121 = vpop.xlane.xlu0 %120
    %vm122 = vcmask 1046534
    %v123 = vsel %vm122, %v12, 0.0
    %v124 = vsel %vm122, %v13, 0.0
    %v125 = vadd.f32 %v123, %v124
    %126 = vadd.xlane.f32.xlu0 %v125
    %v127 = vpop.xlane.xlu0 %126
    %vm128 = vcmask 1047559
    %v129 = vsel %vm128, %v12, 0.0
    %v130 = vsel %vm128, %v13, 0.0
    %v131 = vadd.f32 %v129, %v130
    %132 = vadd.xlane.f32.xlu0 %v131
    %v133 = vpop.xlane.xlu0 %132
    %v134 = vmul.f32 %v115, 0.00390625
    %v135 = vmul.f32 %v118, 0.00390625
    %v136 = vmul.f32 %v134, %v134
    %v137 = vsub.f32 %v135, %v136
    %v138 = vadd.f32 %v137, 1e-05
    %v139 = vrsqrt.pop %v138
    %v140 = vmul.f32 %v139, %v138
    %v141 = vmul.f32 %v140, %v139
    %v142 = vmul.f32 0.5, %v141
    %v143 = vsub.f32 1.5, %v142
    %v144 = vmul.f32 %v139, %v143
    %vm145 = vweird.f32 %v138
    %vm146 = vweird.f32 %v139
    %vm147 = vmor %vm145, %vm146
    %v148 = vsel %vm147, %v139, %v144
    %v149 = vsub.f32 %v39, %v134
    %v150 = vsub.f32 %v59, %v134
    %v151 = vperm.slane %v12, 4
    %v152 = vperm.slane %v13, 4
    %v153 = vmul.f32 %v148, %v151
    %v154 = vmul.f32 %v148, %v152
    %v155 = vmul.f32 %v149, %v153
    %v156 = vmul.f32 %v150, %v154
    %v157 = vperm.slane %v12, 5
    %v158 = vperm.slane %v13, 5
    %v159 = vadd.f32 %v155, %v157
    %v160 = vadd.f32 %v156, %v158
    %v161 = vperm.slane %v127, 6
    %v162 = vmul.f32 %v134, %v161
    %v163 = vsub.f32 %v121, %v162
    %v164 = vmul.f32 %v148, %v163
    %v165 = vperm.slane %v133, 7
    %v166 = vadd.f32 %v164, %v165
    %v167 = vadd.f32 %v79, %v99
    %168 = vadd.xlane.f32.xlu0 %v167
    %v169 = vpop.xlane.xlu0 %168
    %v170 = vadd.f32 %v103, %v104
    %171 = vadd.xlane.f32.xlu0 %v170
    %v172 = vpop.xlane.xlu0 %171
    %v173 = vadd.f32 %v111, %v112
    %174 = vadd.xlane.f32.xlu0 %v173
    %v175 = vpop.xlane.xlu0 %174
    %v176 = vsel %vm122, %v14, 0.0
    %v177 = vsel %vm122, %v15, 0.0
    %v178 = vadd.f32 %v176, %v177
    %179 = vadd.xlane.f32.xlu0 %v178
    %v180 = vpop.xlane.xlu0 %179
    %v181 = vsel %vm128, %v14, 0.0
    %v182 = vsel %vm128, %v15, 0.0
    %v183 = vadd.f32 %v181, %v182
    %184 = vadd.xlane.f32.xlu0 %v183
    %v185 = vpop.xlane.xlu0 %184
    %v186 = vmul.f32 %v169, 0.00390625
    %v187 = vmul.f32 %v172, 0.00390625
    %v188 = vmul.f32 %v186, %v186
    %v189 = vsub.f32 %v187, %v188
    %v190 = vadd.f32 %v189, 1e-05
    %v191 = vrsqrt.pop %v190
    %v192 = vmul.f32 %v191, %v190
    %v193 = vmul.f32 %v192, %v191
    %v194 = vmul.f32 0.5, %v193
    %v195 = vsub.f32 1.5, %v194
    %v196 = vmul.f32 %v191, %v195
    %vm197 = vweird.f32 %v190
    %vm198 = vweird.f32 %v191
    %vm199 = vmor %vm197, %vm198
    %v200 = vsel %vm199, %v191, %v196
    %v201 = vsub.f32 %v79, %v186
    %v202 = vsub.f32 %v99, %v186
    %v203 = vperm.slane %v14, 4
    %v204 = vperm.slane %v15, 4
    %v205 = vmul.f32 %v200, %v203
    %v206 = vmul.f32 %v200, %v204
    %v207 = vmul.f32 %v201, %v205
    %v208 = vmul.f32 %v202, %v206
    %v209 = vperm.slane %v14, 5
    %v210 = vperm.slane %v15, 5
    %v211 = vadd.f32 %v207, %v209
    %v212 = vadd.f32 %v208, %v210
    %v213 = vperm.slane %v180, 6
    %v214 = vmul.f32 %v186, %v213
    %v215 = vsub.f32 %v175, %v214
    %v216 = vmul.f32 %v200, %v215
    %v217 = vperm.slane %v185, 7
    %v218 = vadd.f32 %v216, %v217
    %v219 = vlaneseq
    %v220 = vand.u32 %v219, 127
    %vm221 = vcmp.eq.s32.totalorder %v220, 0
    %vm222 = vcmp.eq.s32.totalorder %v220, 1
    %v223 = vsel %vm222, %v218, 0.0
    %v224 = vsel %vm221, %v166, %v223
    %225 = vst [vmem:[#allocation2] sm:$0xff] %v159
    %226 = vst [vmem:[#allocation2 + $0x8] sm:$0xff] %v160
    %227 = vst [vmem:[#allocation2 + $0x10] sm:$0xff] %v211
    %228 = vst [vmem:[#allocation2 + $0x18] sm:$0xff] %v212
    %229 = vst [vmem:[#allocation2 + $0x20] sm:$0xff] %v224
    // Predicated region
    $region10: #{rfv_critic_forward.1} parent=1 // pred_check
      _
    $region11: #{rfv_critic_forward.1} parent=1 // pred_check_branch
      %231 = sbr.rel (0) target = $region13
    $region12: #{rfv_critic_forward.1} parent=1 // pred_region
      %233 = vsyncadd [#allocation3], 0
      %s235 = sshll.u32 [#allocation2], 4
      %s236 = int_to_ptr.vmem [resolvable:$true] %s235
      %s237 = sshll.u32 %s2, 4
      %s238 = int_to_ptr.hbm [resolvable:$true] %s237
      %240 = dma.vmem_to_hbm [thread:$0]  %s236, 640, %s238, [#allocation3]
    $region13: #{rfv_critic_forward.1} parent=1 // pred_fallthru
      _
    // Predicated region
    $region14: #{rfv_critic_forward.1} parent=1 // pred_check
      _
    $region15: #{rfv_critic_forward.1} parent=1 // pred_check_branch
      %242 = sbr.rel (0) target = $region17
    $region16: #{rfv_critic_forward.1} parent=1 // pred_region
      %244 = dma.done [#allocation3], 640
    $region17: #{rfv_critic_forward.1} parent=1 // pred_fallthru
      _
    %245 = vsyncpa [#allocation3], 1

</llo_original>
